<compile_context>
chip_gen: v7x
topology: tpu7x:2x2x1
jax: 0.10.0
libtpu: 0.0.40
codegen_flags: <defaults>
</compile_context>

<pallas_src>
import functools

import jax
import jax.numpy as jnp
from jax.experimental import pallas as pl
from jax.experimental.pallas import tpu as pltpu

_LANE = 128                         # lane width (last-dim tiling unit)
_SUBLANE = 8                        # f32 sublane height; batch tiles are multiples of this
_NEG = -1e30                        # f32 bias for padded class columns -> exp underflows to 0
_VMEM_BUDGET = 48 * 1024 * 1024     # keep resident footprint under this (v7x: 64 MiB physical)
_VMEM_CAP = 64 * 1024 * 1024        # never ask Mosaic for more than v7x physically has


def _round_up(n: int, m: int) -> int:
    return ((n + m - 1) // m) * m


def _cdiv(a: int, b: int) -> int:
    return -(-a // b)


# --------------------------------------------------------------------------- #
# Kernel body                                                                  #
# --------------------------------------------------------------------------- #
def _stacked_classifier_kernel(x_ref, w1_ref, b1_ref, w2_ref, b2_ref, o_ref):
    # ---- core: linear + bias + relu ----
    # x arrives as f32 straight from HBM; cast to bf16 in-register (no wrapper
    # side pad/cast copy).  Accumulate in f32 on the MXU.
    x = x_ref[...].astype(jnp.bfloat16)
    h = jnp.dot(x, w1_ref[...], preferred_element_type=jnp.float32)
    h = jnp.maximum(h + b1_ref[...], 0.0)            # b1 is (1, Hp) -> broadcast

    # ---- enc_y: linear + bias + softmax over the lane-dense padded class axis ----
    logits = jnp.dot(h.astype(jnp.bfloat16), w2_ref[...],
                     preferred_element_type=jnp.float32)
    logits = logits + b2_ref[...]                    # padded classes carry -1e30 (f32)

    m = jnp.max(logits, axis=-1, keepdims=True)      # real classes dominate the max
    e = jnp.exp(logits - m)                          # padded columns -> exp(-1e30) = 0
    denom = jnp.sum(e, axis=-1, keepdims=True)
    # approx reciprocal: rows sum to 1 within ~1e-3; use exact recip if a
    # downstream consumer takes log(probs) and needs exact normalization.
    o_ref[...] = (e * pl.reciprocal(denom, approx=True)).astype(o_ref.dtype)


# --------------------------------------------------------------------------- #
# One-time parameter preparation (hoisted out of the forward path)             #
# --------------------------------------------------------------------------- #
def prepare_params(w1, b1, w2, b2):
    """Pad / cast the classifier parameters ONCE.

    w1: [D, H]   b1: [1, H] or [H]   w2: [H, C]   b2: [1, C] or [C]
    Returns (w1_p, b1_p, w2_p, b2_p) with H, C padded to lane multiples of 128,
    weights in bf16 and biases in f32 (padded class bias = -1e30, must stay f32).
    """
    D, H = w1.shape
    C = w2.shape[1]
    Hp = _round_up(H, _LANE)
    Cp = _round_up(C, _LANE)

    w1_p = jnp.pad(w1, ((0, 0), (0, Hp - H))).astype(jnp.bfloat16)           # (D, Hp)
    b1_p = jnp.pad(jnp.reshape(b1, (1, H)), ((0, 0), (0, Hp - H))).astype(jnp.float32)
    w2_p = jnp.pad(w2, ((0, Hp - H), (0, Cp - C))).astype(jnp.bfloat16)      # (Hp, Cp)
    b2_p = jnp.pad(jnp.reshape(b2, (1, C)), ((0, 0), (0, Cp - C)),
                   constant_values=_NEG).astype(jnp.float32)                 # keep f32!
    return (w1_p, b1_p, w2_p, b2_p)


# --------------------------------------------------------------------------- #
# Tiling / VMEM heuristics (all static, trace-time Python ints)                #
# --------------------------------------------------------------------------- #
def _batch_tiling(B: int, tb_max: int) -> int:
    """Pick the batch tile.

    * >= 2 tiles (even count) whenever B > 8 so a v7x megacore splits the batch
      across its two TensorCores.
    * tile sized from ceil(B / tiles) so the partial last tile wastes < one
      sublane group of rows (no near-2x batch padding).
    """
    if B <= _SUBLANE:
        return _SUBLANE
    tiles = max(2, _cdiv(B, tb_max))
    if tiles % 2:
        tiles += 1                                   # balanced work on 2 cores
    tb = _round_up(_cdiv(B, tiles), _SUBLANE)
    return min(tb, (B // _SUBLANE) * _SUBLANE)       # never exceed the array extent


def _vmem_needed(tb: int, d: int, hp: int, cp: int, weight_bufs: int) -> int:
    """Rough VMEM footprint (bytes) for one configuration."""
    act = 2 * tb * d * 4 + 2 * tb * cp * 4           # double-buffered x / out tiles
    wgt = weight_bufs * (d * hp * 2 + _SUBLANE * hp * 4
                         + hp * cp * 2 + _SUBLANE * cp * 4)
    tmp = tb * hp * 4 + 2 * tb * cp * 4               # h + softmax temporaries
    return act + wgt + tmp


# --------------------------------------------------------------------------- #
# Forward                                                                      #
# --------------------------------------------------------------------------- #
@functools.partial(
    jax.jit,
    static_argnames=("n_classes", "tb", "single_buffer_weights", "out_dtype"))
def _forward(x, w1_p, b1_p, w2_p, b2_p, *, n_classes, tb=512,
             single_buffer_weights=True, out_dtype=jnp.float32):
    B, D = x.shape
    Hp = w1_p.shape[1]
    Cp = w2_p.shape[1]

    # Only tiny batches (< one sublane group) ever get padded rows.
    if B < _SUBLANE:
        x = jnp.pad(x, ((0, _SUBLANE - B), (0, 0)))
    Bx = x.shape[0]

    weight_bufs = 1 if single_buffer_weights else 2
    TB = _batch_tiling(Bx, tb)
    while TB > _SUBLANE and _vmem_needed(TB, D, Hp, Cp, weight_bufs) > _VMEM_BUDGET:
        TB = max(_SUBLANE, _round_up(TB // 2, _SUBLANE))
    vmem_limit = int(min(_VMEM_CAP,
                         max(32 * 1024 * 1024,
                             1.25 * _vmem_needed(TB, D, Hp, Cp, weight_bufs))))

    grid = (pl.cdiv(Bx, TB),)                         # partial last tile is fine

    out_bytes = jnp.dtype(out_dtype).itemsize
    cost = pl.CostEstimate(
        flops=2 * Bx * D * Hp + 2 * Bx * Hp * Cp,
        transcendentals=Bx * Cp,
        bytes_accessed=(Bx * D * 4 + D * Hp * 2 + Hp * Cp * 2
                        + (Hp + Cp) * 4 + Bx * Cp * out_bytes),
    )

    def resident(shape):
        # Constant index_map -> fetched once; single buffer halves its VMEM cost.
        if single_buffer_weights:
            return pl.BlockSpec(shape, lambda i: (0, 0),
                                pipeline_mode=pl.Buffered(1))
        return pl.BlockSpec(shape, lambda i: (0, 0))

    out_p = pl.pallas_call(
        _stacked_classifier_kernel,
        out_shape=jax.ShapeDtypeStruct((Bx, Cp), out_dtype),
        grid=grid,
        in_specs=[
            # x: batch-tiled, full (unpadded) feature extent, f32, cast in-kernel
            pl.BlockSpec((TB, D), lambda i: (i, 0)),
            resident((D, Hp)),
            resident((1, Hp)),
            resident((Hp, Cp)),
            resident((1, Cp)),
        ],
        out_specs=pl.BlockSpec((TB, Cp), lambda i: (i, 0)),
        compiler_params=pltpu.CompilerParams(
            dimension_semantics=("parallel",),        # shard batch tiles across TCs
            vmem_limit_bytes=vmem_limit,
        ),
        cost_estimate=cost,
    )(x, w1_p, b1_p, w2_p, b2_p)

    return out_p[:B, :n_classes]


def stacked_classifier_forward(x, params, n_classes, *, tb=512,
                               out_dtype=jnp.float32):
    """x: [B, D] f32; params from prepare_params(); returns probs [B, n_classes]."""
    w1_p, b1_p, w2_p, b2_p = params
    try:
        return _forward(x, w1_p, b1_p, w2_p, b2_p, n_classes=n_classes, tb=tb,
                        single_buffer_weights=True, out_dtype=out_dtype)
    except Exception:
        # Fallback for jax builds where pipeline_mode=pl.Buffered(1) is not
        # supported on the top-level pallas_call pipeline: default 2 buffers.
        return _forward(x, w1_p, b1_p, w2_p, b2_p, n_classes=n_classes, tb=tb,
                        single_buffer_weights=False, out_dtype=out_dtype)


def init_params(key, d_in, hidden, n_classes):
    k1, k2, k3, k4 = jax.random.split(key, 4)
    w1 = jax.random.normal(k1, (d_in, hidden), jnp.float32) * (2.0 / d_in) ** 0.5
    b1 = jax.random.normal(k2, (1, hidden), jnp.float32) * 0.01
    w2 = jax.random.normal(k3, (hidden, n_classes), jnp.float32) * (1.0 / hidden) ** 0.5
    b2 = jax.random.normal(k4, (1, n_classes), jnp.float32) * 0.01
    return w1, b1, w2, b2


if __name__ == "__main__":
    key = jax.random.PRNGKey(0)
    kx, kp = jax.random.split(key)

    # Small shapes consistent with an SSVAE classifier head on flattened input.
    B, D_IN, HIDDEN, N_CLASSES = 8, 64, 32, 16
    x = jax.random.normal(kx, (B, D_IN), jnp.float32)
    w1, b1, w2, b2 = init_params(kp, D_IN, HIDDEN, N_CLASSES)

    # Hoisted, one-time pad/cast of the parameters (perf review item #1).
    params = prepare_params(w1, b1, w2, b2)

    probs = stacked_classifier_forward(x, params, N_CLASSES)
    probs = jax.block_until_ready(probs)

    # Reference in plain f32 JAX (kernel uses bf16 matmuls + approx reciprocal,
    # so tolerance is loosened accordingly).
    h_ref = jnp.maximum(x @ w1 + b1, 0.0)
    ref = jax.nn.softmax(h_ref @ w2 + b2, axis=-1)

    assert probs.shape == (B, N_CLASSES)
    assert jnp.allclose(probs, ref, atol=2e-2), float(jnp.max(jnp.abs(probs - ref)))
    assert jnp.allclose(jnp.sum(probs, axis=-1), 1.0, atol=1e-2)

    print("KERNEL_OK")
</pallas_src>

<mosaic_0001>
module attributes {stable_mosaic.version = 11 : i64} {
  func.func @_stacked_classifier_kernel(%arg0: i32, %arg1: memref<8x64xf32, #tpu.memory_space<vmem>>, %arg2: memref<64x128xbf16, #tpu.memory_space<vmem>>, %arg3: memref<1x128xf32, #tpu.memory_space<vmem>>, %arg4: memref<128x128xbf16, #tpu.memory_space<vmem>>, %arg5: memref<1x128xf32, #tpu.memory_space<vmem>>, %arg6: memref<8x128xf32, #tpu.memory_space<vmem>>) attributes {dimension_semantics = [#tpu.dimension_semantics<parallel>], iteration_bounds = array<i64: 1>, scalar_prefetch = 0 : i64, scratch_operands = 0 : i64, tpu.core_type = #tpu.core_type<tc>, window_params = [{transform_indices = @transform_0, window_bounds = array<i64: 8, 64>}, {pipeline_mode = #tpu.pipeline_mode<synchronous>, transform_indices = @transform_1, window_bounds = array<i64: 64, 128>}, {pipeline_mode = #tpu.pipeline_mode<synchronous>, transform_indices = @transform_2, window_bounds = array<i64: 1, 128>}, {pipeline_mode = #tpu.pipeline_mode<synchronous>, transform_indices = @transform_3, window_bounds = array<i64: 128, 128>}, {pipeline_mode = #tpu.pipeline_mode<synchronous>, transform_indices = @transform_4, window_bounds = array<i64: 1, 128>}, {transform_indices = @transform_5, window_bounds = array<i64: 8, 128>}]} {
    %c0 = arith.constant 0 : index
    %c0_0 = arith.constant 0 : index
    %0 = vector.load %arg1[%c0, %c0_0] : memref<8x64xf32, #tpu.memory_space<vmem>>, vector<8x64xf32>
    %1 = arith.truncf %0 : vector<8x64xf32> to vector<8x64xbf16>
    %c0_1 = arith.constant 0 : index
    %c0_2 = arith.constant 0 : index
    %2 = vector.load %arg2[%c0_1, %c0_2] : memref<64x128xbf16, #tpu.memory_space<vmem>>, vector<64x128xbf16>
    %cst = arith.constant dense<0.000000e+00> : vector<8x128xf32>
    %3 = tpu.matmul %1, %2, %cst {dimension_numbers = #tpu.dot_dimension_numbers<[1], [0], [0], [1], [0, 0, 1, 1], [], []>} : vector<8x64xbf16>, vector<64x128xbf16>, vector<8x128xf32> -> vector<8x128xf32>
    %c0_3 = arith.constant 0 : index
    %c0_4 = arith.constant 0 : index
    %4 = vector.load %arg3[%c0_3, %c0_4] : memref<1x128xf32, #tpu.memory_space<vmem>>, vector<1x128xf32>
    %5 = vector.broadcast %4 : vector<1x128xf32> to vector<8x128xf32>
    %6 = arith.addf %3, %5 : vector<8x128xf32>
    %cst_5 = arith.constant 0.000000e+00 : f32
    %7 = vector.broadcast %cst_5 : f32 to vector<8x128xf32>
    %8 = arith.maximumf %6, %7 : vector<8x128xf32>
    %9 = arith.truncf %8 : vector<8x128xf32> to vector<8x128xbf16>
    %c0_6 = arith.constant 0 : index
    %c0_7 = arith.constant 0 : index
    %10 = vector.load %arg4[%c0_6, %c0_7] : memref<128x128xbf16, #tpu.memory_space<vmem>>, vector<128x128xbf16>
    %cst_8 = arith.constant dense<0.000000e+00> : vector<8x128xf32>
    %11 = tpu.matmul %9, %10, %cst_8 {dimension_numbers = #tpu.dot_dimension_numbers<[1], [0], [0], [1], [0, 0, 1, 1], [], []>} : vector<8x128xbf16>, vector<128x128xbf16>, vector<8x128xf32> -> vector<8x128xf32>
    %c0_9 = arith.constant 0 : index
    %c0_10 = arith.constant 0 : index
    %12 = vector.load %arg5[%c0_9, %c0_10] : memref<1x128xf32, #tpu.memory_space<vmem>>, vector<1x128xf32>
    %13 = vector.broadcast %12 : vector<1x128xf32> to vector<8x128xf32>
    %14 = arith.addf %11, %13 : vector<8x128xf32>
    %cst_11 = arith.constant dense<0xFF800000> : vector<8xf32>
    %15 = vector.multi_reduction <maximumf>, %14, %cst_11 [1] : vector<8x128xf32> to vector<8xf32>
    %16 = vector.shape_cast %15 : vector<8xf32> to vector<8x1xf32>
    %17 = vector.broadcast %16 : vector<8x1xf32> to vector<8x128xf32>
    %18 = arith.subf %14, %17 : vector<8x128xf32>
    %19 = math.exp %18 : vector<8x128xf32>
    %cst_12 = arith.constant dense<0.000000e+00> : vector<8xf32>
    %20 = vector.multi_reduction <add>, %19, %cst_12 [1] : vector<8x128xf32> to vector<8xf32>
    %21 = vector.shape_cast %20 : vector<8xf32> to vector<8x1xf32>
    %22 = tpu.reciprocal %21 {approx = true} : vector<8x1xf32> -> vector<8x1xf32>
    %23 = vector.broadcast %22 : vector<8x1xf32> to vector<8x128xf32>
    %24 = arith.mulf %19, %23 : vector<8x128xf32>
    %c0_13 = arith.constant 0 : index
    %c0_14 = arith.constant 0 : index
    %25 = vector.load %arg6[%c0_13, %c0_14] : memref<8x128xf32, #tpu.memory_space<vmem>>, vector<8x128xf32>
    tpu.vector_store %arg6[%c0_13, %c0_14], %24 {strides = array<i32>} : memref<8x128xf32, #tpu.memory_space<vmem>>, vector<8x128xf32>,
    return
  }
  func.func @transform_0(%arg0: i32) -> (i32, i32) {
    %c0_i32 = arith.constant 0 : i32
    %c0_i32_0 = arith.constant 0 : i32
    return %arg0, %c0_i32 : i32, i32
  }
  func.func @transform_1(%arg0: i32) -> (i32, i32) {
    %c0_i32 = arith.constant 0 : i32
    %c0_i32_0 = arith.constant 0 : i32
    %c0_i32_1 = arith.constant 0 : i32
    return %c0_i32, %c0_i32_0 : i32, i32
  }
  func.func @transform_2(%arg0: i32) -> (i32, i32) {
    %c0_i32 = arith.constant 0 : i32
    %c0_i32_0 = arith.constant 0 : i32
    %c0_i32_1 = arith.constant 0 : i32
    return %c0_i32, %c0_i32_0 : i32, i32
  }
  func.func @transform_3(%arg0: i32) -> (i32, i32) {
    %c0_i32 = arith.constant 0 : i32
    %c0_i32_0 = arith.constant 0 : i32
    %c0_i32_1 = arith.constant 0 : i32
    return %c0_i32, %c0_i32_0 : i32, i32
  }
  func.func @transform_4(%arg0: i32) -> (i32, i32) {
    %c0_i32 = arith.constant 0 : i32
    %c0_i32_0 = arith.constant 0 : i32
    %c0_i32_1 = arith.constant 0 : i32
    return %c0_i32, %c0_i32_0 : i32, i32
  }
  func.func @transform_5(%arg0: i32) -> (i32, i32) {
    %c0_i32 = arith.constant 0 : i32
    %c0_i32_0 = arith.constant 0 : i32
    return %arg0, %c0_i32 : i32, i32
  }
}

module attributes {stable_mosaic.version = 11 : i64} {
  func.func @_stacked_classifier_kernel(%arg0: i32, %arg1: memref<8x64xf32, #tpu.memory_space<vmem>>, %arg2: memref<64x128xbf16, #tpu.memory_space<vmem>>, %arg3: memref<1x128xf32, #tpu.memory_space<vmem>>, %arg4: memref<128x128xbf16, #tpu.memory_space<vmem>>, %arg5: memref<1x128xf32, #tpu.memory_space<vmem>>, %arg6: memref<8x128xf32, #tpu.memory_space<vmem>>) attributes {dimension_semantics = [#tpu.dimension_semantics<parallel>], iteration_bounds = array<i64: 1>, scalar_prefetch = 0 : i64, scratch_operands = 0 : i64, tpu.core_type = #tpu.core_type<tc>, window_params = [{transform_indices = @transform_0, window_bounds = array<i64: 8, 64>}, {pipeline_mode = #tpu.pipeline_mode<synchronous>, transform_indices = @transform_1, window_bounds = array<i64: 64, 128>}, {pipeline_mode = #tpu.pipeline_mode<synchronous>, transform_indices = @transform_2, window_bounds = array<i64: 1, 128>}, {pipeline_mode = #tpu.pipeline_mode<synchronous>, transform_indices = @transform_3, window_bounds = array<i64: 128, 128>}, {pipeline_mode = #tpu.pipeline_mode<synchronous>, transform_indices = @transform_4, window_bounds = array<i64: 1, 128>}, {transform_indices = @transform_5, window_bounds = array<i64: 8, 128>}]} {
    %c0 = arith.constant 0 : index
    %c0_0 = arith.constant 0 : index
    %0 = vector.load %arg1[%c0, %c0_0] : memref<8x64xf32, #tpu.memory_space<vmem>>, vector<8x64xf32>
    %1 = arith.truncf %0 : vector<8x64xf32> to vector<8x64xbf16>
    %c0_1 = arith.constant 0 : index
    %c0_2 = arith.constant 0 : index
    %2 = vector.load %arg2[%c0_1, %c0_2] : memref<64x128xbf16, #tpu.memory_space<vmem>>, vector<64x128xbf16>
    %cst = arith.constant dense<0.000000e+00> : vector<8x128xf32>
    %3 = tpu.matmul %1, %2, %cst {dimension_numbers = #tpu.dot_dimension_numbers<[1], [0], [0], [1], [0, 0, 1, 1], [], []>} : vector<8x64xbf16>, vector<64x128xbf16>, vector<8x128xf32> -> vector<8x128xf32>
    %c0_3 = arith.constant 0 : index
    %c0_4 = arith.constant 0 : index
    %4 = vector.load %arg3[%c0_3, %c0_4] : memref<1x128xf32, #tpu.memory_space<vmem>>, vector<1x128xf32>
    %5 = vector.broadcast %4 : vector<1x128xf32> to vector<8x128xf32>
    %6 = arith.addf %3, %5 : vector<8x128xf32>
    %cst_5 = arith.constant 0.000000e+00 : f32
    %7 = vector.broadcast %cst_5 : f32 to vector<8x128xf32>
    %8 = arith.maximumf %6, %7 : vector<8x128xf32>
    %9 = arith.truncf %8 : vector<8x128xf32> to vector<8x128xbf16>
    %c0_6 = arith.constant 0 : index
    %c0_7 = arith.constant 0 : index
    %10 = vector.load %arg4[%c0_6, %c0_7] : memref<128x128xbf16, #tpu.memory_space<vmem>>, vector<128x128xbf16>
    %cst_8 = arith.constant dense<0.000000e+00> : vector<8x128xf32>
    %11 = tpu.matmul %9, %10, %cst_8 {dimension_numbers = #tpu.dot_dimension_numbers<[1], [0], [0], [1], [0, 0, 1, 1], [], []>} : vector<8x128xbf16>, vector<128x128xbf16>, vector<8x128xf32> -> vector<8x128xf32>
    %c0_9 = arith.constant 0 : index
    %c0_10 = arith.constant 0 : index
    %12 = vector.load %arg5[%c0_9, %c0_10] : memref<1x128xf32, #tpu.memory_space<vmem>>, vector<1x128xf32>
    %13 = vector.broadcast %12 : vector<1x128xf32> to vector<8x128xf32>
    %14 = arith.addf %11, %13 : vector<8x128xf32>
    %cst_11 = arith.constant dense<0xFF800000> : vector<8xf32>
    %15 = vector.multi_reduction <maximumf>, %14, %cst_11 [1] : vector<8x128xf32> to vector<8xf32>
    %16 = vector.shape_cast %15 : vector<8xf32> to vector<8x1xf32>
    %17 = vector.broadcast %16 : vector<8x1xf32> to vector<8x128xf32>
    %18 = arith.subf %14, %17 : vector<8x128xf32>
    %19 = math.exp %18 : vector<8x128xf32>
    %cst_12 = arith.constant dense<0.000000e+00> : vector<8xf32>
    %20 = vector.multi_reduction <add>, %19, %cst_12 [1] : vector<8x128xf32> to vector<8xf32>
    %21 = vector.shape_cast %20 : vector<8xf32> to vector<8x1xf32>
    %22 = tpu.reciprocal %21 {approx = true} : vector<8x1xf32> -> vector<8x1xf32>
    %23 = vector.broadcast %22 : vector<8x1xf32> to vector<8x128xf32>
    %24 = arith.mulf %19, %23 : vector<8x128xf32>
    %c0_13 = arith.constant 0 : index
    %c0_14 = arith.constant 0 : index
    %25 = vector.load %arg6[%c0_13, %c0_14] : memref<8x128xf32, #tpu.memory_space<vmem>>, vector<8x128xf32>
    tpu.vector_store %arg6[%c0_13, %c0_14], %24 {strides = array<i32>} : memref<8x128xf32, #tpu.memory_space<vmem>>, vector<8x128xf32>,
    return
  }
  func.func @transform_0(%arg0: i32) -> (i32, i32) {
    %c0_i32 = arith.constant 0 : i32
    %c0_i32_0 = arith.constant 0 : i32
    return %arg0, %c0_i32 : i32, i32
  }
  func.func @transform_1(%arg0: i32) -> (i32, i32) {
    %c0_i32 = arith.constant 0 : i32
    %c0_i32_0 = arith.constant 0 : i32
    %c0_i32_1 = arith.constant 0 : i32
    return %c0_i32, %c0_i32_0 : i32, i32
  }
  func.func @transform_2(%arg0: i32) -> (i32, i32) {
    %c0_i32 = arith.constant 0 : i32
    %c0_i32_0 = arith.constant 0 : i32
    %c0_i32_1 = arith.constant 0 : i32
    return %c0_i32, %c0_i32_0 : i32, i32
  }
  func.func @transform_3(%arg0: i32) -> (i32, i32) {
    %c0_i32 = arith.constant 0 : i32
    %c0_i32_0 = arith.constant 0 : i32
    %c0_i32_1 = arith.constant 0 : i32
    return %c0_i32, %c0_i32_0 : i32, i32
  }
  func.func @transform_4(%arg0: i32) -> (i32, i32) {
    %c0_i32 = arith.constant 0 : i32
    %c0_i32_0 = arith.constant 0 : i32
    %c0_i32_1 = arith.constant 0 : i32
    return %c0_i32, %c0_i32_0 : i32, i32
  }
  func.func @transform_5(%arg0: i32) -> (i32, i32) {
    %c0_i32 = arith.constant 0 : i32
    %c0_i32_0 = arith.constant 0 : i32
    return %arg0, %c0_i32 : i32, i32
  }
}

</mosaic_0001>

<llo_original>
// kernel: _forward.1
$region0: #{_forward.1}
  #allocation0 [shape = 'u32[]', space=smem, size = 0x4, offset = 0x4, fixed_abs, tag = 'smem constant byte address 0x4 - core index']
  #allocation1 [shape = 'u32[144,128]{1,0:T(1,128)}', space=vmem, size = 0x12000, scoped, tag = 'internal scratch']
  %s0 = inlined_call_operand.hbm [shape: f32[8,64], index: 0, kind: input, shape index: {}]
  %s1 = inlined_call_operand.hbm [shape: bf16[64,128], index: 1, kind: input, shape index: {}]
  %s2 = inlined_call_operand.vmem [shape: f32[1,128], index: 2, kind: input, shape index: {}]
  %s3 = inlined_call_operand.hbm [shape: bf16[128,128], index: 3, kind: input, shape index: {}]
  %s4 = inlined_call_operand.vmem [shape: f32[1,128], index: 4, kind: input, shape index: {}]
  %s5 = inlined_call_operand.hbm [shape: f32[8,128], index: 5, kind: output, shape index: {}]
  %s6 = sld [smem:[#allocation0]]
  $region42: #{_forward.1} parent=0
    _
  %s8 = ssub.s32 1, %s6
  %s9 = scalar_select 0, %s8, %s6
  $region1: #{_forward.1} parent=0
    #allocation2 [shape = 'u8[4096]{0}', space=vmem, size = 0x1000, scoped, tag = 'input window, operand 0, single buffered']
    #allocation3 [shape = 's32[1]{0}', space=sflag, size = 0x4, scoped, tag = 'scoped memory for _forward.1']
    #allocation4 [shape = 's32[1]{0}', space=sflag, size = 0x4, scoped, tag = 'scoped memory for _forward.1']
    #allocation5 [shape = 'u8[16384]{0}', space=vmem, size = 0x4000, scoped, tag = 'input window, operand 1, single buffered']
    #allocation6 [shape = 's32[1]{0}', space=sflag, size = 0x4, scoped, tag = 'scoped memory for _forward.1']
    #allocation7 [shape = 'u8[32768]{0}', space=vmem, size = 0x8000, scoped, tag = 'input window, operand 3, single buffered']
    #allocation8 [shape = 'u8[4096]{0}', space=vmem, size = 0x1000, scoped, tag = 'output window, operand 0, single buffered']
    %10 = vsyncpa [#allocation3], 0
    %11 = vsyncpa [#allocation6], 0
    %12 = vsyncpa [#allocation4], 0
    // Predicated region
    $region2: #{_forward.1} parent=1 // pred_check
      _
    $region3: #{_forward.1} parent=1 // pred_check_branch
      %14 = sbr.rel (0) target = $region5
    $region4: #{_forward.1} parent=1 // pred_region
      %s16 = ssub.s32 128, 128
      %17 = vsyncadd [#allocation3], %s16
      %s19 = sshll.u32 [#allocation2], 4
      %s20 = int_to_ptr.vmem [resolvable:$true] %s19
      %22 = dma.hbm_to_vmem [thread:$0]  %s0, 128, %s20, [#allocation3]
    $region5: #{_forward.1} parent=1 // pred_fallthru
      _
    // Predicated region
    $region6: #{_forward.1} parent=1 // pred_check
      _
    $region7: #{_forward.1} parent=1 // pred_check_branch
      %24 = sbr.rel (0) target = $region9
    $region8: #{_forward.1} parent=1 // pred_region
      %s26 = ssub.s32 512, 512
      %27 = vsyncadd [#allocation6], %s26
      %s28 = sshll.u32 [#allocation5], 4
      %s29 = int_to_ptr.vmem [resolvable:$true] %s28
      %34 = dma.hbm_to_vmem [thread:$0]  %s1, 512, %s29, [#allocation6], 64, 64, 4
    $region9: #{_forward.1} parent=1 // pred_fallthru
      _
    // Predicated region
    $region10: #{_forward.1} parent=1 // pred_check
      _
    $region11: #{_forward.1} parent=1 // pred_check_branch
      %36 = sbr.rel (0) target = $region13
    $region12: #{_forward.1} parent=1 // pred_region
      _
    $region13: #{_forward.1} parent=1 // pred_fallthru
      _
    // Predicated region
    $region14: #{_forward.1} parent=1 // pred_check
      _
    $region15: #{_forward.1} parent=1 // pred_check_branch
      %38 = sbr.rel (0) target = $region17
    $region16: #{_forward.1} parent=1 // pred_region
      %s40 = ssub.s32 1024, 1024
      %41 = vsyncadd [#allocation6], %s40
      %s42 = sshll.u32 [#allocation7], 4
      %s43 = int_to_ptr.vmem [resolvable:$true] %s42
      %48 = dma.hbm_to_vmem [thread:$0]  %s3, 1024, %s43, [#allocation6], 64, 64, 4
    $region17: #{_forward.1} parent=1 // pred_fallthru
      _
    // Predicated region
    $region18: #{_forward.1} parent=1 // pred_check
      _
    $region19: #{_forward.1} parent=1 // pred_check_branch
      %50 = sbr.rel (0) target = $region21
    $region20: #{_forward.1} parent=1 // pred_region
      _
    $region21: #{_forward.1} parent=1 // pred_fallthru
      _
    // Predicated region
    $region22: #{_forward.1} parent=1 // pred_check
      _
    $region23: #{_forward.1} parent=1 // pred_check_branch
      %52 = sbr.rel (0) target = $region25
    $region24: #{_forward.1} parent=1 // pred_region
      %53 = dma.done [#allocation3], 128
    $region25: #{_forward.1} parent=1 // pred_fallthru
      _
    // Predicated region
    $region26: #{_forward.1} parent=1 // pred_check
      _
    $region27: #{_forward.1} parent=1 // pred_check_branch
      %55 = sbr.rel (0) target = $region29
    $region28: #{_forward.1} parent=1 // pred_region
      %56 = dma.done [#allocation6], 512
    $region29: #{_forward.1} parent=1 // pred_fallthru
      _
    // Predicated region
    $region30: #{_forward.1} parent=1 // pred_check
      _
    $region31: #{_forward.1} parent=1 // pred_check_branch
      %58 = sbr.rel (0) target = $region33
    $region32: #{_forward.1} parent=1 // pred_region
      %59 = dma.done [#allocation6], 1024
    $region33: #{_forward.1} parent=1 // pred_fallthru
      _
    %v61 = vld [vmem:[#allocation2] sm:$0xff]
    %v62 = vpack.c.bf16 %v61, %v61
    %v63 = vld [vmem:[#allocation5] sm:$0xf]
    %v64 = vld [vmem:[#allocation5 + $0x4] sm:$0xf]
    %v65 = vld [vmem:[#allocation5 + $0x8] sm:$0xf]
    %v66 = vld [vmem:[#allocation5 + $0xc] sm:$0xf]
    %v67 = vld [vmem:[#allocation5 + $0x10] sm:$0xf]
    %v68 = vld [vmem:[#allocation5 + $0x14] sm:$0xf]
    %v69 = vld [vmem:[#allocation5 + $0x18] sm:$0xf]
    %v70 = vld [vmem:[#allocation5 + $0x1c] sm:$0xf]
    %v71 = vld [vmem:[%s2] sm:$0x1]
    %v73 = vlaneseq
    %v74 = vshrl.u32 %v73, 7
    %v75 = vsub.s32 0, %v74
    %v76 = vrot.slane %v71, %v75
    %v86 = vunpack.c.l.b16 %v63
    %v87 = vunpack.c.l.b16 %v64
    %v88 = vunpack.c.l.b16 %v65
    %v89 = vunpack.c.l.b16 %v66
    %v90 = vunpack.c.l.b16 %v67
    %v91 = vunpack.c.l.b16 %v68
    %v92 = vunpack.c.l.b16 %v69
    %v93 = vunpack.c.l.b16 %v70
    %v94 = vpack.c.b16 %v87, %v86
    %v95 = vpack.c.b16 %v89, %v88
    %v96 = vpack.c.b16 %v91, %v90
    %v97 = vpack.c.b16 %v93, %v92
    %vm102 = vcmask 523264
    %v104 = vsel %vm102, %v62, 0
    %106 = vmatprep.subr.bf16.mxu0 0
    %107 = vmatpush1.bf16.msra.mxu0 %v94
    %108 = vmatprep.subr.bf16.mxu0 0
    %109 = vmatpush1.bf16.msra.mxu0 %v95
    %110 = vmatprep.subr.bf16.mxu0 0
    %111 = vmatpush1.bf16.msra.mxu0 %v96
    %112 = vmatprep.subr.bf16.mxu0 0
    %113 = vmatpush1.bf16.msra.mxu0 %v97
    %114 = vmatprep.subr.bf16.mxu0 0
    %115 = vmatpush1.bf16.msra.mxu0 0
    %116 = vmatprep.subr.bf16.mxu0 0
    %117 = vmatpush1.bf16.msra.mxu0 0
    %118 = vmatprep.subr.bf16.mxu0 0
    %119 = vmatpush1.bf16.msra.mxu0 0
    %120 = vmatprep.subr.bf16.mxu0 0
    %121 = vmatpush1.bf16.msra.mxu0 0
    %122 = vmatprep.subr.bf16.mxu0 0
    %123 = vmatpush1.bf16.msra.mxu0 0
    %124 = vmatprep.subr.bf16.mxu0 0
    %125 = vmatpush1.bf16.msra.mxu0 0
    %126 = vmatprep.subr.bf16.mxu0 0
    %127 = vmatpush1.bf16.msra.mxu0 0
    %128 = vmatprep.subr.bf16.mxu0 0
    %129 = vmatpush1.bf16.msra.mxu0 0
    %130 = vmatprep.subr.bf16.mxu0 0
    %131 = vmatpush1.bf16.msra.mxu0 0
    %132 = vmatprep.subr.bf16.mxu0 0
    %133 = vmatpush1.bf16.msra.mxu0 0
    %134 = vmatprep.subr.bf16.mxu0 0
    %135 = vmatpush1.bf16.msra.mxu0 0
    %136 = vmatprep.subr.bf16.mxu0 0
    %137 = vmatpush1.bf16.msra.mxu0 0
    %138 = vmatprep.mubr.bf16.mxu0 0
    %139 = vmatmul.mubr.bf16.gmra.mrb[0].mxu0 %v104
    %v140 = vpop.f32.mrb[0].mxu0
    %v141 = vadd.f32 %v76, %v140
    %v142 = vpop.f32.mrb[0].mxu0
    %v143 = vpop.f32.mrb[0].mxu0
    %v144 = vpop.f32.mrb[0].mxu0
    %145 = vdwg.mxu0
    %v146 = vmax.f32 %v141, 0.0
    %v147 = vpack.c.bf16 %v146, %v146
    %v148 = vld [vmem:[#allocation7] sm:$0xf]
    %v149 = vld [vmem:[#allocation7 + $0x4] sm:$0xf]
    %v150 = vld [vmem:[#allocation7 + $0x8] sm:$0xf]
    %v151 = vld [vmem:[#allocation7 + $0xc] sm:$0xf]
    %v152 = vld [vmem:[#allocation7 + $0x10] sm:$0xf]
    %v153 = vld [vmem:[#allocation7 + $0x14] sm:$0xf]
    %v154 = vld [vmem:[#allocation7 + $0x18] sm:$0xf]
    %v155 = vld [vmem:[#allocation7 + $0x1c] sm:$0xf]
    %v156 = vld [vmem:[#allocation7 + $0x20] sm:$0xf]
    %v157 = vld [vmem:[#allocation7 + $0x24] sm:$0xf]
    %v158 = vld [vmem:[#allocation7 + $0x28] sm:$0xf]
    %v159 = vld [vmem:[#allocation7 + $0x2c] sm:$0xf]
    %v160 = vld [vmem:[#allocation7 + $0x30] sm:$0xf]
    %v161 = vld [vmem:[#allocation7 + $0x34] sm:$0xf]
    %v162 = vld [vmem:[#allocation7 + $0x38] sm:$0xf]
    %v163 = vld [vmem:[#allocation7 + $0x3c] sm:$0xf]
    %v164 = vld [vmem:[%s4] sm:$0x1]
    %v166 = vlaneseq
    %v167 = vshrl.u32 %v166, 7
    %v168 = vsub.s32 0, %v167
    %v169 = vrot.slane %v164, %v168
    %v187 = vunpack.c.l.b16 %v148
    %v188 = vunpack.c.l.b16 %v149
    %v189 = vunpack.c.l.b16 %v150
    %v190 = vunpack.c.l.b16 %v151
    %v191 = vunpack.c.l.b16 %v152
    %v192 = vunpack.c.l.b16 %v153
    %v193 = vunpack.c.l.b16 %v154
    %v194 = vunpack.c.l.b16 %v155
    %v195 = vunpack.c.l.b16 %v156
    %v196 = vunpack.c.l.b16 %v157
    %v197 = vunpack.c.l.b16 %v158
    %v198 = vunpack.c.l.b16 %v159
    %v199 = vunpack.c.l.b16 %v160
    %v200 = vunpack.c.l.b16 %v161
    %v201 = vunpack.c.l.b16 %v162
    %v202 = vunpack.c.l.b16 %v163
    %v203 = vpack.c.b16 %v188, %v187
    %v204 = vpack.c.b16 %v190, %v189
    %v205 = vpack.c.b16 %v192, %v191
    %v206 = vpack.c.b16 %v194, %v193
    %v207 = vpack.c.b16 %v196, %v195
    %v208 = vpack.c.b16 %v198, %v197
    %v209 = vpack.c.b16 %v200, %v199
    %v210 = vpack.c.b16 %v202, %v201
    %219 = vmatprep.subr.bf16.mxu0 0
    %220 = vmatpush1.bf16.msra.mxu0 %v203
    %221 = vmatprep.subr.bf16.mxu0 0
    %222 = vmatpush1.bf16.msra.mxu0 %v204
    %223 = vmatprep.subr.bf16.mxu0 0
    %224 = vmatpush1.bf16.msra.mxu0 %v205
    %225 = vmatprep.subr.bf16.mxu0 0
    %226 = vmatpush1.bf16.msra.mxu0 %v206
    %227 = vmatprep.subr.bf16.mxu0 0
    %228 = vmatpush1.bf16.msra.mxu0 %v207
    %229 = vmatprep.subr.bf16.mxu0 0
    %230 = vmatpush1.bf16.msra.mxu0 %v208
    %231 = vmatprep.subr.bf16.mxu0 0
    %232 = vmatpush1.bf16.msra.mxu0 %v209
    %233 = vmatprep.subr.bf16.mxu0 0
    %234 = vmatpush1.bf16.msra.mxu0 %v210
    %235 = vmatprep.subr.bf16.mxu0 0
    %236 = vmatpush1.bf16.msra.mxu0 0
    %237 = vmatprep.subr.bf16.mxu0 0
    %238 = vmatpush1.bf16.msra.mxu0 0
    %239 = vmatprep.subr.bf16.mxu0 0
    %240 = vmatpush1.bf16.msra.mxu0 0
    %241 = vmatprep.subr.bf16.mxu0 0
    %242 = vmatpush1.bf16.msra.mxu0 0
    %243 = vmatprep.subr.bf16.mxu0 0
    %244 = vmatpush1.bf16.msra.mxu0 0
    %245 = vmatprep.subr.bf16.mxu0 0
    %246 = vmatpush1.bf16.msra.mxu0 0
    %247 = vmatprep.subr.bf16.mxu0 0
    %248 = vmatpush1.bf16.msra.mxu0 0
    %249 = vmatprep.subr.bf16.mxu0 0
    %250 = vmatpush1.bf16.msra.mxu0 0
    %251 = vmatprep.mubr.bf16.mxu0 0
    %252 = vmatmul.mubr.bf16.gmra.mrb[0].mxu0 %v147
    %v253 = vpop.f32.mrb[0].mxu0
    %v254 = vadd.f32 %v169, %v253
    %v255 = vpop.f32.mrb[0].mxu0
    %v256 = vpop.f32.mrb[0].mxu0
    %v257 = vpop.f32.mrb[0].mxu0
    %258 = vdwg.mxu0
    %259 = vmax.xlane.f32.xlu0 %v254
    %v260 = vpop.xlane.xlu0 %259
    %v261 = vsub.f32 %v254, %v260
    %v262 = vmul.f32 %v261, 1.442695
    %v263 = vpow.pop %v262
    %264 = vadd.xlane.f32.xlu0 %v263
    %v265 = vpop.xlane.xlu0 %264
    %v266 = vrcp.pop %v265
    %v267 = vmul.f32 %v263, %v266
    %268 = vst [vmem:[#allocation8] sm:$0xff] %v267
    // Predicated region
    $region34: #{_forward.1} parent=1 // pred_check
      _
    $region35: #{_forward.1} parent=1 // pred_check_branch
      %270 = sbr.rel (0) target = $region37
    $region36: #{_forward.1} parent=1 // pred_region
      %s272 = ssub.s32 128, 128
      %273 = vsyncadd [#allocation4], %s272
      %s275 = sshll.u32 [#allocation8], 4
      %s276 = int_to_ptr.vmem [resolvable:$true] %s275
      %278 = dma.vmem_to_hbm [thread:$0]  %s276, 128, %s5, [#allocation4]
    $region37: #{_forward.1} parent=1 // pred_fallthru
      _
    // Predicated region
    $region38: #{_forward.1} parent=1 // pred_check
      _
    $region39: #{_forward.1} parent=1 // pred_check_branch
      %280 = sbr.rel (0) target = $region41
    $region40: #{_forward.1} parent=1 // pred_region
      %281 = dma.done [#allocation4], 128
    $region41: #{_forward.1} parent=1 // pred_fallthru
      _
    %282 = vsyncpa [#allocation3], 1
    %283 = vsyncpa [#allocation6], 1
    %284 = vsyncpa [#allocation4], 1

// kernel: _forward.1
$region0: #{_forward.1}
  #allocation0 [shape = 'u32[]', space=smem, size = 0x4, offset = 0x4, fixed_abs, tag = 'smem constant byte address 0x4 - core index']
  #allocation1 [shape = 'u32[144,128]{1,0:T(1,128)}', space=vmem, size = 0x12000, scoped, tag = 'internal scratch']
  %s0 = inlined_call_operand.hbm [shape: f32[8,64], index: 0, kind: input, shape index: {}]
  %s1 = inlined_call_operand.hbm [shape: bf16[64,128], index: 1, kind: input, shape index: {}]
  %s2 = inlined_call_operand.vmem [shape: f32[1,128], index: 2, kind: input, shape index: {}]
  %s3 = inlined_call_operand.hbm [shape: bf16[128,128], index: 3, kind: input, shape index: {}]
  %s4 = inlined_call_operand.vmem [shape: f32[1,128], index: 4, kind: input, shape index: {}]
  %s5 = inlined_call_operand.hbm [shape: f32[8,128], index: 5, kind: output, shape index: {}]
  %s6 = sld [smem:[#allocation0]]
  $region42: #{_forward.1} parent=0
    _
  %s8 = ssub.s32 1, %s6
  %s9 = scalar_select 0, %s8, %s6
  $region1: #{_forward.1} parent=0
    #allocation2 [shape = 'u8[4096]{0}', space=vmem, size = 0x1000, scoped, tag = 'input window, operand 0, single buffered']
    #allocation3 [shape = 's32[1]{0}', space=sflag, size = 0x4, scoped, tag = 'scoped memory for _forward.1']
    #allocation4 [shape = 's32[1]{0}', space=sflag, size = 0x4, scoped, tag = 'scoped memory for _forward.1']
    #allocation5 [shape = 'u8[16384]{0}', space=vmem, size = 0x4000, scoped, tag = 'input window, operand 1, single buffered']
    #allocation6 [shape = 's32[1]{0}', space=sflag, size = 0x4, scoped, tag = 'scoped memory for _forward.1']
    #allocation7 [shape = 'u8[32768]{0}', space=vmem, size = 0x8000, scoped, tag = 'input window, operand 3, single buffered']
    #allocation8 [shape = 'u8[4096]{0}', space=vmem, size = 0x1000, scoped, tag = 'output window, operand 0, single buffered']
    %10 = vsyncpa [#allocation3], 0
    %11 = vsyncpa [#allocation6], 0
    %12 = vsyncpa [#allocation4], 0
    // Predicated region
    $region2: #{_forward.1} parent=1 // pred_check
      _
    $region3: #{_forward.1} parent=1 // pred_check_branch
      %14 = sbr.rel (0) target = $region5
    $region4: #{_forward.1} parent=1 // pred_region
      %s16 = ssub.s32 128, 128
      %17 = vsyncadd [#allocation3], %s16
      %s19 = sshll.u32 [#allocation2], 4
      %s20 = int_to_ptr.vmem [resolvable:$true] %s19
      %22 = dma.hbm_to_vmem [thread:$0]  %s0, 128, %s20, [#allocation3]
    $region5: #{_forward.1} parent=1 // pred_fallthru
      _
    // Predicated region
    $region6: #{_forward.1} parent=1 // pred_check
      _
    $region7: #{_forward.1} parent=1 // pred_check_branch
      %24 = sbr.rel (0) target = $region9
    $region8: #{_forward.1} parent=1 // pred_region
      %s26 = ssub.s32 512, 512
      %27 = vsyncadd [#allocation6], %s26
      %s28 = sshll.u32 [#allocation5], 4
      %s29 = int_to_ptr.vmem [resolvable:$true] %s28
      %34 = dma.hbm_to_vmem [thread:$0]  %s1, 512, %s29, [#allocation6], 64, 64, 4
    $region9: #{_forward.1} parent=1 // pred_fallthru
      _
    // Predicated region
    $region10: #{_forward.1} parent=1 // pred_check
      _
    $region11: #{_forward.1} parent=1 // pred_check_branch
      %36 = sbr.rel (0) target = $region13
    $region12: #{_forward.1} parent=1 // pred_region
      _
    $region13: #{_forward.1} parent=1 // pred_fallthru
      _
    // Predicated region
    $region14: #{_forward.1} parent=1 // pred_check
      _
    $region15: #{_forward.1} parent=1 // pred_check_branch
      %38 = sbr.rel (0) target = $region17
    $region16: #{_forward.1} parent=1 // pred_region
      %s40 = ssub.s32 1024, 1024
      %41 = vsyncadd [#allocation6], %s40
      %s42 = sshll.u32 [#allocation7], 4
      %s43 = int_to_ptr.vmem [resolvable:$true] %s42
      %48 = dma.hbm_to_vmem [thread:$0]  %s3, 1024, %s43, [#allocation6], 64, 64, 4
    $region17: #{_forward.1} parent=1 // pred_fallthru
      _
    // Predicated region
    $region18: #{_forward.1} parent=1 // pred_check
      _
    $region19: #{_forward.1} parent=1 // pred_check_branch
      %50 = sbr.rel (0) target = $region21
    $region20: #{_forward.1} parent=1 // pred_region
      _
    $region21: #{_forward.1} parent=1 // pred_fallthru
      _
    // Predicated region
    $region22: #{_forward.1} parent=1 // pred_check
      _
    $region23: #{_forward.1} parent=1 // pred_check_branch
      %52 = sbr.rel (0) target = $region25
    $region24: #{_forward.1} parent=1 // pred_region
      %53 = dma.done [#allocation3], 128
    $region25: #{_forward.1} parent=1 // pred_fallthru
      _
    // Predicated region
    $region26: #{_forward.1} parent=1 // pred_check
      _
    $region27: #{_forward.1} parent=1 // pred_check_branch
      %55 = sbr.rel (0) target = $region29
    $region28: #{_forward.1} parent=1 // pred_region
      %56 = dma.done [#allocation6], 512
    $region29: #{_forward.1} parent=1 // pred_fallthru
      _
    // Predicated region
    $region30: #{_forward.1} parent=1 // pred_check
      _
    $region31: #{_forward.1} parent=1 // pred_check_branch
      %58 = sbr.rel (0) target = $region33
    $region32: #{_forward.1} parent=1 // pred_region
      %59 = dma.done [#allocation6], 1024
    $region33: #{_forward.1} parent=1 // pred_fallthru
      _
    %v61 = vld [vmem:[#allocation2] sm:$0xff]
    %v62 = vpack.c.bf16 %v61, %v61
    %v63 = vld [vmem:[#allocation5] sm:$0xf]
    %v64 = vld [vmem:[#allocation5 + $0x4] sm:$0xf]
    %v65 = vld [vmem:[#allocation5 + $0x8] sm:$0xf]
    %v66 = vld [vmem:[#allocation5 + $0xc] sm:$0xf]
    %v67 = vld [vmem:[#allocation5 + $0x10] sm:$0xf]
    %v68 = vld [vmem:[#allocation5 + $0x14] sm:$0xf]
    %v69 = vld [vmem:[#allocation5 + $0x18] sm:$0xf]
    %v70 = vld [vmem:[#allocation5 + $0x1c] sm:$0xf]
    %v71 = vld [vmem:[%s2] sm:$0x1]
    %v73 = vlaneseq
    %v74 = vshrl.u32 %v73, 7
    %v75 = vsub.s32 0, %v74
    %v76 = vrot.slane %v71, %v75
    %v86 = vunpack.c.l.b16 %v63
    %v87 = vunpack.c.l.b16 %v64
    %v88 = vunpack.c.l.b16 %v65
    %v89 = vunpack.c.l.b16 %v66
    %v90 = vunpack.c.l.b16 %v67
    %v91 = vunpack.c.l.b16 %v68
    %v92 = vunpack.c.l.b16 %v69
    %v93 = vunpack.c.l.b16 %v70
    %v94 = vpack.c.b16 %v87, %v86
    %v95 = vpack.c.b16 %v89, %v88
    %v96 = vpack.c.b16 %v91, %v90
    %v97 = vpack.c.b16 %v93, %v92
    %vm102 = vcmask 523264
    %v104 = vsel %vm102, %v62, 0
    %106 = vmatprep.subr.bf16.mxu0 0
    %107 = vmatpush1.bf16.msra.mxu0 %v94
    %108 = vmatprep.subr.bf16.mxu0 0
    %109 = vmatpush1.bf16.msra.mxu0 %v95
    %110 = vmatprep.subr.bf16.mxu0 0
    %111 = vmatpush1.bf16.msra.mxu0 %v96
    %112 = vmatprep.subr.bf16.mxu0 0
    %113 = vmatpush1.bf16.msra.mxu0 %v97
    %114 = vmatprep.subr.bf16.mxu0 0
    %115 = vmatpush1.bf16.msra.mxu0 0
    %116 = vmatprep.subr.bf16.mxu0 0
    %117 = vmatpush1.bf16.msra.mxu0 0
    %118 = vmatprep.subr.bf16.mxu0 0
    %119 = vmatpush1.bf16.msra.mxu0 0
    %120 = vmatprep.subr.bf16.mxu0 0
    %121 = vmatpush1.bf16.msra.mxu0 0
    %122 = vmatprep.subr.bf16.mxu0 0
    %123 = vmatpush1.bf16.msra.mxu0 0
    %124 = vmatprep.subr.bf16.mxu0 0
    %125 = vmatpush1.bf16.msra.mxu0 0
    %126 = vmatprep.subr.bf16.mxu0 0
    %127 = vmatpush1.bf16.msra.mxu0 0
    %128 = vmatprep.subr.bf16.mxu0 0
    %129 = vmatpush1.bf16.msra.mxu0 0
    %130 = vmatprep.subr.bf16.mxu0 0
    %131 = vmatpush1.bf16.msra.mxu0 0
    %132 = vmatprep.subr.bf16.mxu0 0
    %133 = vmatpush1.bf16.msra.mxu0 0
    %134 = vmatprep.subr.bf16.mxu0 0
    %135 = vmatpush1.bf16.msra.mxu0 0
    %136 = vmatprep.subr.bf16.mxu0 0
    %137 = vmatpush1.bf16.msra.mxu0 0
    %138 = vmatprep.mubr.bf16.mxu0 0
    %139 = vmatmul.mubr.bf16.gmra.mrb[0].mxu0 %v104
    %v140 = vpop.f32.mrb[0].mxu0
    %v141 = vadd.f32 %v76, %v140
    %v142 = vpop.f32.mrb[0].mxu0
    %v143 = vpop.f32.mrb[0].mxu0
    %v144 = vpop.f32.mrb[0].mxu0
    %145 = vdwg.mxu0
    %v146 = vmax.f32 %v141, 0.0
    %v147 = vpack.c.bf16 %v146, %v146
    %v148 = vld [vmem:[#allocation7] sm:$0xf]
    %v149 = vld [vmem:[#allocation7 + $0x4] sm:$0xf]
    %v150 = vld [vmem:[#allocation7 + $0x8] sm:$0xf]
    %v151 = vld [vmem:[#allocation7 + $0xc] sm:$0xf]
    %v152 = vld [vmem:[#allocation7 + $0x10] sm:$0xf]
    %v153 = vld [vmem:[#allocation7 + $0x14] sm:$0xf]
    %v154 = vld [vmem:[#allocation7 + $0x18] sm:$0xf]
    %v155 = vld [vmem:[#allocation7 + $0x1c] sm:$0xf]
    %v156 = vld [vmem:[#allocation7 + $0x20] sm:$0xf]
    %v157 = vld [vmem:[#allocation7 + $0x24] sm:$0xf]
    %v158 = vld [vmem:[#allocation7 + $0x28] sm:$0xf]
    %v159 = vld [vmem:[#allocation7 + $0x2c] sm:$0xf]
    %v160 = vld [vmem:[#allocation7 + $0x30] sm:$0xf]
    %v161 = vld [vmem:[#allocation7 + $0x34] sm:$0xf]
    %v162 = vld [vmem:[#allocation7 + $0x38] sm:$0xf]
    %v163 = vld [vmem:[#allocation7 + $0x3c] sm:$0xf]
    %v164 = vld [vmem:[%s4] sm:$0x1]
    %v166 = vlaneseq
    %v167 = vshrl.u32 %v166, 7
    %v168 = vsub.s32 0, %v167
    %v169 = vrot.slane %v164, %v168
    %v187 = vunpack.c.l.b16 %v148
    %v188 = vunpack.c.l.b16 %v149
    %v189 = vunpack.c.l.b16 %v150
    %v190 = vunpack.c.l.b16 %v151
    %v191 = vunpack.c.l.b16 %v152
    %v192 = vunpack.c.l.b16 %v153
    %v193 = vunpack.c.l.b16 %v154
    %v194 = vunpack.c.l.b16 %v155
    %v195 = vunpack.c.l.b16 %v156
    %v196 = vunpack.c.l.b16 %v157
    %v197 = vunpack.c.l.b16 %v158
    %v198 = vunpack.c.l.b16 %v159
    %v199 = vunpack.c.l.b16 %v160
    %v200 = vunpack.c.l.b16 %v161
    %v201 = vunpack.c.l.b16 %v162
    %v202 = vunpack.c.l.b16 %v163
    %v203 = vpack.c.b16 %v188, %v187
    %v204 = vpack.c.b16 %v190, %v189
    %v205 = vpack.c.b16 %v192, %v191
    %v206 = vpack.c.b16 %v194, %v193
    %v207 = vpack.c.b16 %v196, %v195
    %v208 = vpack.c.b16 %v198, %v197
    %v209 = vpack.c.b16 %v200, %v199
    %v210 = vpack.c.b16 %v202, %v201
    %219 = vmatprep.subr.bf16.mxu0 0
    %220 = vmatpush1.bf16.msra.mxu0 %v203
    %221 = vmatprep.subr.bf16.mxu0 0
    %222 = vmatpush1.bf16.msra.mxu0 %v204
    %223 = vmatprep.subr.bf16.mxu0 0
    %224 = vmatpush1.bf16.msra.mxu0 %v205
    %225 = vmatprep.subr.bf16.mxu0 0
    %226 = vmatpush1.bf16.msra.mxu0 %v206
    %227 = vmatprep.subr.bf16.mxu0 0
    %228 = vmatpush1.bf16.msra.mxu0 %v207
    %229 = vmatprep.subr.bf16.mxu0 0
    %230 = vmatpush1.bf16.msra.mxu0 %v208
    %231 = vmatprep.subr.bf16.mxu0 0
    %232 = vmatpush1.bf16.msra.mxu0 %v209
    %233 = vmatprep.subr.bf16.mxu0 0
    %234 = vmatpush1.bf16.msra.mxu0 %v210
    %235 = vmatprep.subr.bf16.mxu0 0
    %236 = vmatpush1.bf16.msra.mxu0 0
    %237 = vmatprep.subr.bf16.mxu0 0
    %238 = vmatpush1.bf16.msra.mxu0 0
    %239 = vmatprep.subr.bf16.mxu0 0
    %240 = vmatpush1.bf16.msra.mxu0 0
    %241 = vmatprep.subr.bf16.mxu0 0
    %242 = vmatpush1.bf16.msra.mxu0 0
    %243 = vmatprep.subr.bf16.mxu0 0
    %244 = vmatpush1.bf16.msra.mxu0 0
    %245 = vmatprep.subr.bf16.mxu0 0
    %246 = vmatpush1.bf16.msra.mxu0 0
    %247 = vmatprep.subr.bf16.mxu0 0
    %248 = vmatpush1.bf16.msra.mxu0 0
    %249 = vmatprep.subr.bf16.mxu0 0
    %250 = vmatpush1.bf16.msra.mxu0 0
    %251 = vmatprep.mubr.bf16.mxu0 0
    %252 = vmatmul.mubr.bf16.gmra.mrb[0].mxu0 %v147
    %v253 = vpop.f32.mrb[0].mxu0
    %v254 = vadd.f32 %v169, %v253
    %v255 = vpop.f32.mrb[0].mxu0
    %v256 = vpop.f32.mrb[0].mxu0
    %v257 = vpop.f32.mrb[0].mxu0
    %258 = vdwg.mxu0
    %259 = vmax.xlane.f32.xlu0 %v254
    %v260 = vpop.xlane.xlu0 %259
    %v261 = vsub.f32 %v254, %v260
    %v262 = vmul.f32 %v261, 1.442695
    %v263 = vpow.pop %v262
    %264 = vadd.xlane.f32.xlu0 %v263
    %v265 = vpop.xlane.xlu0 %264
    %v266 = vrcp.pop %v265
    %v267 = vmul.f32 %v263, %v266
    %268 = vst [vmem:[#allocation8] sm:$0xff] %v267
    // Predicated region
    $region34: #{_forward.1} parent=1 // pred_check
      _
    $region35: #{_forward.1} parent=1 // pred_check_branch
      %270 = sbr.rel (0) target = $region37
    $region36: #{_forward.1} parent=1 // pred_region
      %s272 = ssub.s32 128, 128
      %273 = vsyncadd [#allocation4], %s272
      %s275 = sshll.u32 [#allocation8], 4
      %s276 = int_to_ptr.vmem [resolvable:$true] %s275
      %278 = dma.vmem_to_hbm [thread:$0]  %s276, 128, %s5, [#allocation4]
    $region37: #{_forward.1} parent=1 // pred_fallthru
      _
    // Predicated region
    $region38: #{_forward.1} parent=1 // pred_check
      _
    $region39: #{_forward.1} parent=1 // pred_check_branch
      %280 = sbr.rel (0) target = $region41
    $region40: #{_forward.1} parent=1 // pred_region
      %281 = dma.done [#allocation4], 128
    $region41: #{_forward.1} parent=1 // pred_fallthru
      _
    %282 = vsyncpa [#allocation3], 1
    %283 = vsyncpa [#allocation6], 1
    %284 = vsyncpa [#allocation4], 1

</llo_original>
